<compile_context>
chip_gen: v7x
topology: tpu7x:2x2x1
jax: 0.10.0
libtpu: 0.0.40
codegen_flags: <defaults>
</compile_context>

<pallas_src>
import functools

import jax
import jax.numpy as jnp
from jax import lax
from jax.experimental import pallas as pl
from jax.experimental.pallas import tpu as pltpu


def _simsiam_kernel(p_ref, z_ref, out_ref, acc_ref,
                    *, batch, block_rows, eps, need_mask):
    b = pl.program_id(0)

    @pl.when(b == 0)
    def _init():
        acc_ref[...] = jnp.zeros_like(acc_ref)

    # Up-cast inside the kernel (rides spare VALU slots); HBM bytes stay at the
    # caller's native dtype (bf16 inputs => half the DMA traffic).
    p = p_ref[...].astype(jnp.float32)   # (Bt, D)
    z = z_ref[...].astype(jnp.float32)   # (Bt, D)

    # Per-row dot product and squared norms (lane reduction over D).
    w12 = jnp.sum(p * z, axis=-1, keepdims=True)   # (Bt, 1)
    w1 = jnp.sum(p * p, axis=-1, keepdims=True)    # (Bt, 1)
    w2 = jnp.sum(z * z, axis=-1, keepdims=True)    # (Bt, 1)

    # PyTorch: w12 / sqrt(clamp_min(w1*w2, eps^2)); rsqrt goes to the EUP.
    cos = w12 * lax.rsqrt(jnp.maximum(w1 * w2, eps * eps))   # (Bt, 1)

    if need_mask:
        # Zero contributions from padded rows in the final partial block.
        row = b * block_rows + lax.broadcasted_iota(jnp.int32, cos.shape, 0)
        cos = jnp.where(row < batch, cos, 0.0)

    # Deferred accumulation: keep a per-row running sum; no scalar reduce and
    # no masked (1,1) store until the last grid step.
    acc_ref[...] += cos

    @pl.when(b == pl.num_programs(0) - 1)
    def _finalize():
        total = jnp.sum(acc_ref[...], axis=0, keepdims=True)   # (1, 1)
        out_ref[...] = total * (-1.0 / float(batch))


def simsiam_loss(p, z, *, block_rows=None, eps=1e-8):
    """-mean(cosine_similarity(p, z, dim=-1)); p, z of shape (..., D)."""
    assert p.shape == z.shape, (p.shape, z.shape)
    d = p.shape[-1]
    p2 = p.reshape(-1, d)
    z2 = z.reshape(-1, d)
    B, D = p2.shape

    itemsize = max(jnp.dtype(p2.dtype).itemsize, jnp.dtype(z2.dtype).itemsize)
    if block_rows is None:
        # ~2 MiB per input block => 2 inputs x 2 pipeline buffers ~= 8 MiB of
        # VMEM, comfortably within v7x's 64 MiB (and v5e/v6e's 128 MiB).
        block_rows = max(8, ((2 << 20) // max(1, D * itemsize)) // 8 * 8)

    if B <= block_rows:
        bt = B                                    # full-dim block, no padding
    else:
        bt = max(8, (min(block_rows, B) // 8) * 8)  # keep (8, 128) sublane rule

    grid = (pl.cdiv(B, bt),)
    need_mask = (B % bt) != 0

    kernel = functools.partial(_simsiam_kernel, batch=B, block_rows=bt,
                               eps=float(eps), need_mask=need_mask)

    in_spec = pl.BlockSpec((bt, D), lambda i: (i, 0))

    out = pl.pallas_call(
        kernel,
        out_shape=jax.ShapeDtypeStruct((1, 1), jnp.float32),
        grid_spec=pltpu.PrefetchScalarGridSpec(
            num_scalar_prefetch=0,
            grid=grid,
            in_specs=[in_spec, in_spec],
            out_specs=pl.BlockSpec((1, 1), lambda i: (0, 0)),
            scratch_shapes=[pltpu.VMEM((bt, 1), jnp.float32)],
        ),
        compiler_params=pltpu.CompilerParams(
            dimension_semantics=("arbitrary",)),
        cost_estimate=pl.CostEstimate(
            flops=8 * B * D,
            transcendentals=B,
            bytes_accessed=p2.size * itemsize + z2.size * itemsize + 4),
    )(p2, z2)

    return out[0, 0]


def reference(p, z, eps=1e-8):
    d = p.shape[-1]
    p2 = p.reshape(-1, d).astype(jnp.float32)
    z2 = z.reshape(-1, d).astype(jnp.float32)
    w12 = jnp.sum(p2 * z2, axis=-1)
    w1 = jnp.sum(p2 * p2, axis=-1)
    w2 = jnp.sum(z2 * z2, axis=-1)
    cos = w12 / jnp.sqrt(jnp.maximum(w1 * w2, eps * eps))
    return -jnp.mean(cos)


if __name__ == "__main__":
    B, D = 16, 256
    key = jax.random.PRNGKey(0)
    kp, kz = jax.random.split(key)
    p = jax.random.normal(kp, (B, D), dtype=jnp.float32)
    z = jax.random.normal(kz, (B, D), dtype=jnp.float32)

    # Full batch, block_rows=8 -> 2 grid steps, exercises the accumulator.
    loss = simsiam_loss(p, z, block_rows=8)
    jax.block_until_ready(loss)
    ref = reference(p, z)
    assert jnp.allclose(loss, ref, rtol=1e-5, atol=1e-6), (loss, ref)

    # Ragged batch (B=10, block=8) -> exercises the padded-row mask path.
    loss_r = simsiam_loss(p[:10], z[:10], block_rows=8)
    jax.block_until_ready(loss_r)
    ref_r = reference(p[:10], z[:10])
    assert jnp.allclose(loss_r, ref_r, rtol=1e-5, atol=1e-6), (loss_r, ref_r)

    print("KERNEL_OK")
</pallas_src>

<mosaic_0001>
module attributes {stable_mosaic.version = 11 : i64} {
  func.func @_simsiam_kernel(%arg0: i32, %arg1: memref<8x256xf32, #tpu.memory_space<vmem>>, %arg2: memref<8x256xf32, #tpu.memory_space<vmem>>, %arg3: memref<1x1xf32, #tpu.memory_space<vmem>>, %arg4: memref<8x1xf32, #tpu.memory_space<vmem>>) attributes {dimension_semantics = [#tpu.dimension_semantics<arbitrary>], iteration_bounds = array<i64: 2>, scalar_prefetch = 0 : i64, scratch_operands = 1 : i64, tpu.core_type = #tpu.core_type<tc>, window_params = [{transform_indices = @transform_0, window_bounds = array<i64: 8, 256>}, {transform_indices = @transform_1, window_bounds = array<i64: 8, 256>}, {pipeline_mode = #tpu.pipeline_mode<synchronous>, transform_indices = @transform_2, window_bounds = array<i64: 1, 1>}]} {
    %c0_i32 = arith.constant 0 : i32
    %0 = arith.cmpi eq, %arg0, %c0_i32 : i32
    %1 = arith.extui %0 : i1 to i32
    %c0_i32_0 = arith.constant 0 : i32
    %2 = arith.cmpi ne, %1, %c0_i32_0 : i32
    scf.if %2 {
      %cst_12 = arith.constant 0.000000e+00 : f32
      %25 = vector.broadcast %cst_12 : f32 to vector<8x1xf32>
      %c0_13 = arith.constant 0 : index
      %c0_14 = arith.constant 0 : index
      %26 = vector.load %arg4[%c0_13, %c0_14] : memref<8x1xf32, #tpu.memory_space<vmem>>, vector<8x1xf32>
      tpu.vector_store %arg4[%c0_13, %c0_14], %25 {strides = array<i32>} : memref<8x1xf32, #tpu.memory_space<vmem>>, vector<8x1xf32>,
    } else {
    }
    %c0 = arith.constant 0 : index
    %c0_1 = arith.constant 0 : index
    %3 = vector.load %arg1[%c0, %c0_1] : memref<8x256xf32, #tpu.memory_space<vmem>>, vector<8x256xf32>
    %c0_2 = arith.constant 0 : index
    %c0_3 = arith.constant 0 : index
    %4 = vector.load %arg2[%c0_2, %c0_3] : memref<8x256xf32, #tpu.memory_space<vmem>>, vector<8x256xf32>
    %5 = arith.mulf %3, %4 : vector<8x256xf32>
    %cst = arith.constant dense<0.000000e+00> : vector<8xf32>
    %6 = vector.multi_reduction <add>, %5, %cst [1] : vector<8x256xf32> to vector<8xf32>
    %7 = vector.shape_cast %6 : vector<8xf32> to vector<8x1xf32>
    %8 = arith.mulf %3, %3 : vector<8x256xf32>
    %cst_4 = arith.constant dense<0.000000e+00> : vector<8xf32>
    %9 = vector.multi_reduction <add>, %8, %cst_4 [1] : vector<8x256xf32> to vector<8xf32>
    %10 = vector.shape_cast %9 : vector<8xf32> to vector<8x1xf32>
    %11 = arith.mulf %4, %4 : vector<8x256xf32>
    %cst_5 = arith.constant dense<0.000000e+00> : vector<8xf32>
    %12 = vector.multi_reduction <add>, %11, %cst_5 [1] : vector<8x256xf32> to vector<8xf32>
    %13 = vector.shape_cast %12 : vector<8xf32> to vector<8x1xf32>
    %14 = arith.mulf %10, %13 : vector<8x1xf32>
    %cst_6 = arith.constant 1.000000e-16 : f32
    %15 = vector.broadcast %cst_6 : f32 to vector<8x1xf32>
    %16 = arith.maximumf %14, %15 : vector<8x1xf32>
    %17 = math.rsqrt %16 : vector<8x1xf32>
    %18 = arith.mulf %7, %17 : vector<8x1xf32>
    %c0_7 = arith.constant 0 : index
    %c0_8 = arith.constant 0 : index
    %19 = vector.load %arg4[%c0_7, %c0_8] : memref<8x1xf32, #tpu.memory_space<vmem>>, vector<8x1xf32>
    %20 = arith.addf %19, %18 : vector<8x1xf32>
    %c0_9 = arith.constant 0 : index
    %c0_10 = arith.constant 0 : index
    %21 = vector.load %arg4[%c0_9, %c0_10] : memref<8x1xf32, #tpu.memory_space<vmem>>, vector<8x1xf32>
    tpu.vector_store %arg4[%c0_9, %c0_10], %20 {strides = array<i32>} : memref<8x1xf32, #tpu.memory_space<vmem>>, vector<8x1xf32>,
    %c1_i32 = arith.constant 1 : i32
    %22 = arith.cmpi eq, %arg0, %c1_i32 : i32
    %23 = arith.extui %22 : i1 to i32
    %c0_i32_11 = arith.constant 0 : i32
    %24 = arith.cmpi ne, %23, %c0_i32_11 : i32
    scf.if %24 {
      %c0_12 = arith.constant 0 : index
      %c0_13 = arith.constant 0 : index
      %25 = vector.load %arg4[%c0_12, %c0_13] : memref<8x1xf32, #tpu.memory_space<vmem>>, vector<8x1xf32>
      %cst_14 = arith.constant dense<0.000000e+00> : vector<1xf32>
      %26 = vector.multi_reduction <add>, %25, %cst_14 [0] : vector<8x1xf32> to vector<1xf32>
      %27 = vector.shape_cast %26 : vector<1xf32> to vector<1x1xf32>
      %cst_15 = arith.constant -6.250000e-02 : f32
      %28 = vector.broadcast %cst_15 : f32 to vector<1x1xf32>
      %29 = arith.mulf %27, %28 : vector<1x1xf32>
      %c0_16 = arith.constant 0 : index
      %c0_17 = arith.constant 0 : index
      %30 = vector.load %arg3[%c0_16, %c0_17] : memref<1x1xf32, #tpu.memory_space<vmem>>, vector<1x1xf32>
      tpu.vector_store %arg3[%c0_16, %c0_17], %29 {strides = array<i32>} : memref<1x1xf32, #tpu.memory_space<vmem>>, vector<1x1xf32>,
    } else {
    }
    return
  }
  func.func @transform_0(%arg0: i32) -> (i32, i32) {
    %c0_i32 = arith.constant 0 : i32
    %c0_i32_0 = arith.constant 0 : i32
    return %arg0, %c0_i32 : i32, i32
  }
  func.func @transform_1(%arg0: i32) -> (i32, i32) {
    %c0_i32 = arith.constant 0 : i32
    %c0_i32_0 = arith.constant 0 : i32
    return %arg0, %c0_i32 : i32, i32
  }
  func.func @transform_2(%arg0: i32) -> (i32, i32) {
    %c0_i32 = arith.constant 0 : i32
    %c0_i32_0 = arith.constant 0 : i32
    %c0_i32_1 = arith.constant 0 : i32
    return %c0_i32, %c0_i32_0 : i32, i32
  }
}

</mosaic_0001>

<llo_original>
// kernel: tpu_custom_call.1
$region0: #{tpu_custom_call.1}
  #allocation0 [shape = 'u32[]', space=smem, size = 0x4, offset = 0x4, fixed_abs, tag = 'smem constant byte address 0x4 - core index']
  #allocation1 [shape = 'u32[144,128]{1,0:T(1,128)}', space=vmem, size = 0x12000, scoped, tag = 'internal scratch']
  #allocation2 [shape = 'f32[8,1]{1,0:T(8,128)}', space=vmem, size = 0x1000, scoped, tag = 'scratch operand']
  %s0 = inlined_call_operand.hbm [shape: f32[16,256], index: 0, kind: input, shape index: {}]
  %s1 = inlined_call_operand.hbm [shape: f32[16,256], index: 1, kind: input, shape index: {}]
  %s2 = inlined_call_operand.hbm [shape: f32[1,1], index: 2, kind: output, shape index: {}]
  %s3 = sld [smem:[#allocation0]]
  $region57: #{tpu_custom_call.1} parent=0
    _
  %s5 = ssub.s32 1, %s3
  %s6 = scalar_select 0, %s5, %s3
  $region1: #{tpu_custom_call.1} parent=0
    #allocation3 [shape = 'u8[16384]{0}', space=vmem, size = 0x4000, scoped, tag = 'input window, operand 0']
    #allocation4 [shape = 's32[2]{0}', space=sflag, size = 0x8, scoped, tag = 'scoped memory for tpu_custom_call.1']
    #allocation5 [shape = 's32[2]{0}', space=sflag, size = 0x8, scoped, tag = 'scoped memory for tpu_custom_call.1']
    #allocation6 [shape = 'u8[16384]{0}', space=vmem, size = 0x4000, scoped, tag = 'input window, operand 1']
    #allocation7 [shape = 's32[2]{0}', space=sflag, size = 0x8, scoped, tag = 'scoped memory for tpu_custom_call.1']
    #allocation8 [shape = 'u8[512]{0}', space=vmem, size = 0x400, scoped, tag = 'output window, operand 0, single buffered']
    %7 = vsyncpa [#allocation4], 0
    %s8 = scalar_lea.sflag [#allocation4], 1
    %9 = vsyncpa %s8, 0
    %10 = vsyncpa [#allocation7], 0
    %s11 = scalar_lea.sflag [#allocation7], 1
    %12 = vsyncpa %s11, 0
    %13 = vsyncpa [#allocation5], 0
    loop: start=0, step=1, limit=4
    $region2: #{tpu_custom_call.1} parent=1 // loop_pre_header
      _
    $region3: #{tpu_custom_call.1} parent=1 // loop_header
      %s15 = sphi 0, %s19
      %p16 = scmp.ge.s32.totalorder %s15, 4
      %s25 = sphi 0, %s27
      %s28 = sphi 0, %s25
      %s29 = sphi 0, %s28
      %s45 = sphi 0, %s29
      %s51 = sphi 0, %s53
      %s54 = sphi 0, %s51
      %s55 = sphi 0, %s54
      %s71 = sphi 0, %s55
      %s75 = sphi 0, %s75
      %s77 = sphi 0, %s75
      %s78 = sphi 0, %s77
      %s92 = sphi 0, %s78
    $region4: #{tpu_custom_call.1} parent=1 // loop_header_branch
      %18 = sbr.rel (%p16) target = $region8
    $region5: #{tpu_custom_call.1} parent=1 // loop_body
      %s20 = ssub.s32 %s15, 1
      %s21 = ssub.s32 %s15, 2
      %s22 = sadd.s32 %s15, 1
      %s23 = ssub.s32 %s15, %s22
      %p24 = scmp.eq.s32.totalorder %s23, 0
      %s26 = sadd.s32 %s25, 1
      %s27 = scalar_select %p24, %s25, %s26
      %p30 = pneg %p24
      %p31 = scmp.eq.s32.totalorder %s15, 1
      %p32 = por %p30, %p31
      %p33 = scmp.ne.s32.totalorder %s25, %s28
      %p34 = scmp.eq.s32.totalorder %s15, 0
      %p35 = por %p33, %p34
      %p36 = scmp.ne.s32.totalorder %s25, %s28
      %p37 = scmp.eq.s32.totalorder %s20, 1
      %p38 = por %p36, %p37
      %p39 = scmp.ne.s32.totalorder %s28, %s29
      %p40 = scmp.eq.s32.totalorder %s20, 0
      %p41 = por %p39, %p40
      %p42 = scmp.ne.s32.totalorder %s28, %s29
      %p43 = scmp.eq.s32.totalorder %s21, 1
      %p44 = por %p42, %p43
      %p46 = scmp.ne.s32.totalorder %s29, %s45
      %p47 = scmp.eq.s32.totalorder %s21, 0
      %p48 = por %p46, %p47
      %s49 = ssub.s32 %s15, %s22
      %p50 = scmp.eq.s32.totalorder %s49, 0
      %s52 = sadd.s32 %s51, 1
      %s53 = scalar_select %p50, %s51, %s52
      %p56 = pneg %p50
      %p57 = scmp.eq.s32.totalorder %s15, 1
      %p58 = por %p56, %p57
      %p59 = scmp.ne.s32.totalorder %s51, %s54
      %p60 = scmp.eq.s32.totalorder %s15, 0
      %p61 = por %p59, %p60
      %p62 = scmp.ne.s32.totalorder %s51, %s54
      %p63 = scmp.eq.s32.totalorder %s20, 1
      %p64 = por %p62, %p63
      %p65 = scmp.ne.s32.totalorder %s54, %s55
      %p66 = scmp.eq.s32.totalorder %s20, 0
      %p67 = por %p65, %p66
      %p68 = scmp.ne.s32.totalorder %s54, %s55
      %p69 = scmp.eq.s32.totalorder %s21, 1
      %p70 = por %p68, %p69
      %p72 = scmp.ne.s32.totalorder %s55, %s71
      %p73 = scmp.eq.s32.totalorder %s21, 0
      %p74 = por %p72, %p73
      %s76 = sadd.s32 %s75, 1
      %p79 = scmp.eq.s32.totalorder %s15, 1
      %p80 = scmp.ne.s32.totalorder %s75, %s77
      %p81 = scmp.eq.s32.totalorder %s15, 0
      %p82 = por %p80, %p81
      %p83 = scmp.ne.s32.totalorder %s75, %s77
      %p84 = scmp.eq.s32.totalorder %s20, 1
      %p85 = por %p83, %p84
      %p86 = scmp.ne.s32.totalorder %s77, %s78
      %p87 = scmp.eq.s32.totalorder %s20, 0
      %p88 = por %p86, %p87
      %p89 = scmp.ne.s32.totalorder %s77, %s78
      %p90 = scmp.eq.s32.totalorder %s21, 1
      %p91 = por %p89, %p90
      %p93 = scmp.ne.s32.totalorder %s78, %s92
      %p94 = scmp.eq.s32.totalorder %s21, 0
      %p95 = por %p93, %p94
      %p96 = scmp.le.s32.totalorder 1, %s15
      %p97 = scmp.lt.s32.totalorder %s15, 3
      %p98 = pnand %p96, %p97
      %p99 = pneg %p98
      // Predicated region
      $region9: #{tpu_custom_call.1} parent=5 // pred_check
        _
      $region10: #{tpu_custom_call.1} parent=5 // pred_check_branch
        %101 = sbr.rel (%p98) target = $region12
      $region11: #{tpu_custom_call.1} parent=5 // pred_region
        %s102 = ssub.s32 %s15, 1
      $region12: #{tpu_custom_call.1} parent=5 // pred_fallthru
        _
      %p103 = scmp.lt.s32.totalorder %s15, 2
      // Predicated region
      $region13: #{tpu_custom_call.1} parent=5 // pred_check
        %p104 = pneg %p103
      $region14: #{tpu_custom_call.1} parent=5 // pred_check_branch
        %106 = sbr.rel (%p104) target = $region16
      $region15: #{tpu_custom_call.1} parent=5 // pred_region
        // Predicated region
        $region17: #{tpu_custom_call.1} parent=15 // pred_check
          %p107 = pneg %p35
        $region18: #{tpu_custom_call.1} parent=15 // pred_check_branch
          %109 = sbr.rel (%p107) target = $region20
        $region19: #{tpu_custom_call.1} parent=15 // pred_region
          %s110 = sand.u32 %s25, 1
          %s111 = scalar_lea.sflag [#allocation4], %s110
          %s112 = sand.u32 %s25, 1
          %s113 = smul.addr %s112, 16
          %s114 = scalar_lea.vmem [#allocation3], %s113
          %s116 = ssub.s32 256, 256
          %117 = vsyncadd %s111, %s116
          %s118 = smul.addr %s15, 2
          %s119 = smul.addr %s118, 128
          %s120 = scalar_lea.hbm %s0, %s119
          %s122 = sshll.u32 %s114, 4
          %s123 = int_to_ptr.vmem [resolvable:$true] %s122
          %125 = dma.hbm_to_vmem [thread:$0]  %s120, 256, %s123, %s111
        $region20: #{tpu_custom_call.1} parent=15 // pred_fallthru
          _
        // Predicated region
        $region21: #{tpu_custom_call.1} parent=15 // pred_check
          %p126 = pneg %p61
        $region22: #{tpu_custom_call.1} parent=15 // pred_check_branch
          %128 = sbr.rel (%p126) target = $region24
        $region23: #{tpu_custom_call.1} parent=15 // pred_region
          %s129 = sand.u32 %s51, 1
          %s130 = scalar_lea.sflag [#allocation7], %s129
          %s131 = sand.u32 %s51, 1
          %s132 = smul.addr %s131, 16
          %s133 = scalar_lea.vmem [#allocation6], %s132
          %s135 = ssub.s32 256, 256
          %136 = vsyncadd %s130, %s135
          %s137 = smul.addr %s15, 2
          %s138 = smul.addr %s137, 128
          %s139 = scalar_lea.hbm %s1, %s138
          %s141 = sshll.u32 %s133, 4
          %s142 = int_to_ptr.vmem [resolvable:$true] %s141
          %144 = dma.hbm_to_vmem [thread:$0]  %s139, 256, %s142, %s130
        $region24: #{tpu_custom_call.1} parent=15 // pred_fallthru
          _
      $region16: #{tpu_custom_call.1} parent=5 // pred_fallthru
        _
      %p145 = scmp.le.s32.totalorder 1, %s15
      %p146 = scmp.lt.s32.totalorder %s15, 3
      %p147 = pnand %p145, %p146
      %p148 = pneg %p147
      // Predicated region
      $region25: #{tpu_custom_call.1} parent=5 // pred_check
        _
      $region26: #{tpu_custom_call.1} parent=5 // pred_check_branch
        %150 = sbr.rel (%p147) target = $region28
      $region27: #{tpu_custom_call.1} parent=5 // pred_region
        %s151 = ssub.s32 %s15, 1
        %s152 = sand.u32 %s28, 1
        %s153 = scalar_lea.sflag [#allocation4], %s152
        %s154 = sand.u32 %s28, 1
        %s155 = smul.addr %s154, 16
        %s156 = scalar_lea.vmem [#allocation3], %s155
        // Predicated region
        $region29: #{tpu_custom_call.1} parent=27 // pred_check
          %p157 = pneg %p41
        $region30: #{tpu_custom_call.1} parent=27 // pred_check_branch
          %159 = sbr.rel (%p157) target = $region32
        $region31: #{tpu_custom_call.1} parent=27 // pred_region
          %160 = dma.done %s153, 256
        $region32: #{tpu_custom_call.1} parent=27 // pred_fallthru
          _
        %s161 = sand.u32 %s54, 1
        %s162 = scalar_lea.sflag [#allocation7], %s161
        %s163 = sand.u32 %s54, 1
        %s164 = smul.addr %s163, 16
        %s165 = scalar_lea.vmem [#allocation6], %s164
        // Predicated region
        $region33: #{tpu_custom_call.1} parent=27 // pred_check
          %p166 = pneg %p67
        $region34: #{tpu_custom_call.1} parent=27 // pred_check_branch
          %168 = sbr.rel (%p166) target = $region36
        $region35: #{tpu_custom_call.1} parent=27 // pred_region
          %169 = dma.done %s162, 256
        $region36: #{tpu_custom_call.1} parent=27 // pred_fallthru
          _
        %s170 = sand.u32 %s28, 1
        %s171 = scalar_lea.sflag [#allocation4], %s170
        %s172 = sand.u32 %s28, 1
        %s173 = smul.addr %s172, 16
        %s174 = scalar_lea.vmem [#allocation3], %s173
        %p175 = pneg %p41
        %p176 = pneg %p38
        %s177 = sand.u32 %s54, 1
        %s178 = scalar_lea.sflag [#allocation7], %s177
        %s179 = sand.u32 %s54, 1
        %s180 = smul.addr %s179, 16
        %s181 = scalar_lea.vmem [#allocation6], %s180
        %p182 = pneg %p67
        %p183 = pneg %p64
        %p184 = pneg %p88
        %p185 = pneg %p85
        %p186 = scmp.eq.s32.totalorder %s20, 0
        // Predicated region
        $region37: #{tpu_custom_call.1} parent=27 // pred_check
          %p187 = pneg %p186
        $region38: #{tpu_custom_call.1} parent=27 // pred_check_branch
          %189 = sbr.rel (%p187) target = $region40
        $region39: #{tpu_custom_call.1} parent=27 // pred_region
          %vm190 = vcmask 7168
          %191 = vst.msk [vmem:[#allocation2] sm:$0xff] %vm190, 0.0
        $region40: #{tpu_custom_call.1} parent=27 // pred_fallthru
          _
        %v192 = vld [vmem:[%s156] sm:$0xff]
        %v193 = vld [vmem:[%s156 + $0x8] sm:$0xff]
        %v194 = vld [vmem:[%s165] sm:$0xff]
        %v195 = vld [vmem:[%s165 + $0x8] sm:$0xff]
        %v196 = vmul.f32 %v192, %v194
        %v197 = vmul.f32 %v193, %v195
        %v198 = vadd.f32 %v196, %v197
        %199 = vadd.xlane.f32.xlu0 %v198
        %v200 = vpop.xlane.xlu0 %199
        %v201 = vmul.f32 %v192, %v192
        %v202 = vmul.f32 %v193, %v193
        %v203 = vadd.f32 %v201, %v202
        %204 = vadd.xlane.f32.xlu0 %v203
        %v205 = vpop.xlane.xlu0 %204
        %v206 = vmul.f32 %v194, %v194
        %v207 = vmul.f32 %v195, %v195
        %v208 = vadd.f32 %v206, %v207
        %209 = vadd.xlane.f32.xlu0 %v208
        %v210 = vpop.xlane.xlu0 %209
        %v211 = vmul.f32 %v205, %v210
        %v212 = vmax.f32 %v211, 1e-16
        %v213 = vrsqrt.pop %v212
        %v214 = vmul.f32 %v200, %v213
        %v215 = vld [vmem:[#allocation2] sm:$0xff]
        %v216 = vadd.f32 %v215, %v214
        %vm217 = vcmask 7168
        %218 = vst.msk [vmem:[#allocation2] sm:$0xff] %vm217, %v216
        %p219 = scmp.eq.s32.totalorder %s20, 1
        // Predicated region
        $region41: #{tpu_custom_call.1} parent=27 // pred_check
          %p220 = pneg %p219
        $region42: #{tpu_custom_call.1} parent=27 // pred_check_branch
          %222 = sbr.rel (%p220) target = $region44
        $region43: #{tpu_custom_call.1} parent=27 // pred_region
          %v223 = vld [vmem:[#allocation2] sm:$0xff]
          %v224 = vsel %vm217, %v223, 0.0
          %v225 = vrot.slane %v224, 4
          %v226 = vadd.f32 %v224, %v225
          %v227 = vrot.slane %v226, 2
          %v228 = vadd.f32 %v226, %v227
          %v229 = vrot.slane %v228, 1
          %v230 = vadd.f32 %v228, %v229
          %v231 = vmul.f32 %v230, -0.0625
          %vm232 = vcmask 0
          %233 = vst.msk [vmem:[#allocation8] sm:$0x1] %vm232, %v231
        $region44: #{tpu_custom_call.1} parent=27 // pred_fallthru
          _
        // Predicated region
        $region45: #{tpu_custom_call.1} parent=27 // pred_check
          %p234 = pneg %p85
        $region46: #{tpu_custom_call.1} parent=27 // pred_check_branch
          %236 = sbr.rel (%p234) target = $region48
        $region47: #{tpu_custom_call.1} parent=27 // pred_region
          %s238 = ssub.s32 16, 16
          %239 = vsyncadd [#allocation5], %s238
          %s241 = sshll.u32 [#allocation8], 4
          %s242 = int_to_ptr.vmem [resolvable:$true] %s241
          %244 = dma.vmem_to_hbm [thread:$0]  %s242, 16, %s2, [#allocation5]
        $region48: #{tpu_custom_call.1} parent=27 // pred_fallthru
          _
        // Predicated region
        $region49: #{tpu_custom_call.1} parent=27 // pred_check
          %p245 = pneg %p85
        $region50: #{tpu_custom_call.1} parent=27 // pred_check_branch
          %247 = sbr.rel (%p245) target = $region52
        $region51: #{tpu_custom_call.1} parent=27 // pred_region
          %248 = dma.done [#allocation5], 16
        $region52: #{tpu_custom_call.1} parent=27 // pred_fallthru
          _
      $region28: #{tpu_custom_call.1} parent=5 // pred_fallthru
        _
      %p249 = scmp.le.s32.totalorder 2, %s15
      // Predicated region
      $region53: #{tpu_custom_call.1} parent=5 // pred_check
        %p250 = pneg %p249
      $region54: #{tpu_custom_call.1} parent=5 // pred_check_branch
        %252 = sbr.rel (%p250) target = $region56
      $region55: #{tpu_custom_call.1} parent=5 // pred_region
        %s253 = ssub.s32 %s15, 2
      $region56: #{tpu_custom_call.1} parent=5 // pred_fallthru
        _
    $region6: #{tpu_custom_call.1} parent=1 // loop_footer
      %s19 = sadd.s32 1, %s15
    $region7: #{tpu_custom_call.1} parent=1 // loop_footer_branch
      %14 = sbr.rel target = $region3
    $region8: #{tpu_custom_call.1} parent=1 // loop_exit
      _
    %254 = vsyncpa [#allocation4], 1
    %s255 = scalar_lea.sflag [#allocation4], 1
    %256 = vsyncpa %s255, 1
    %257 = vsyncpa [#allocation7], 1
    %s258 = scalar_lea.sflag [#allocation7], 1
    %259 = vsyncpa %s258, 1
    %260 = vsyncpa [#allocation5], 1
    %s261 = scalar_lea.sflag [#allocation5], 1
    %262 = vsyncpa %s261, 1

</llo_original>
